<compile_context>
chip_gen: v7x
topology: tpu7x:2x2x1
jax: 0.10.0
libtpu: 0.0.40
codegen_flags: <defaults>
</compile_context>

<pallas_src>
import functools

import jax
import jax.numpy as jnp
from jax.experimental import pallas as pl
from jax.experimental.pallas import tpu as pltpu


# --------------------------- fused Pallas chain ------------------------------
#
# A "chain" is a static tuple of ops:
#   ("linear", w_param_idx, b_param_idx)  -> h = h @ W + b   (bf16 MXU, f32 acc)
#   ("relu",)                             -> h = max(h, 0)   (f32)
# Weights are pre-transposed to (in, out); biases are (1, out) f32.

_MAX_TB = 512  # rows per grid step; big tiles amortize per-step overhead,
               # VMEM footprint stays tiny, and B > 512 gives >=2 steps (v7x).


@functools.partial(jax.jit, static_argnames=("ops", "out_dim"))
def _pallas_chain(x, params, *, ops, out_dim):
    B, d_in = x.shape

    if B <= _MAX_TB:
        tb = B            # full-extent block: always layout-legal, one step
    else:
        tb = _MAX_TB      # multiple of 8; ragged tail block is masked by Pallas
    grid = (pl.cdiv(B, tb),)

    def kernel(*refs):
        x_ref, o_ref = refs[0], refs[-1]
        prefs = refs[1:-1]
        h = x_ref[...].astype(jnp.float32)
        for op in ops:
            if op[0] == "linear":
                w = prefs[op[1]][...]          # bf16, (in, out), pre-transposed
                b = prefs[op[2]][...]          # f32,  (1, out)
                # bf16 MXU matmul, f32 accumulate; bias add on the accumulator.
                h = jnp.dot(h.astype(w.dtype), w,
                            preferred_element_type=jnp.float32) + b
            else:                              # relu on the f32 accumulator
                h = jnp.maximum(h, 0.0)
        o_ref[...] = h.astype(o_ref.dtype)

    # Activations: true last dim (full extent -> legal, no lane padding in HBM).
    in_specs = [pl.BlockSpec((tb, d_in), lambda i: (i, 0))]
    # Params (tiny) stay VMEM-resident: same (0, 0) block for every grid step.
    in_specs += [pl.BlockSpec(p.shape, lambda i: (0, 0)) for p in params]

    return pl.pallas_call(
        kernel,
        out_shape=jax.ShapeDtypeStruct((B, out_dim), x.dtype),
        grid=grid,
        in_specs=in_specs,
        out_specs=pl.BlockSpec((tb, out_dim), lambda i: (i, 0)),
        compiler_params=pltpu.CompilerParams(
            dimension_semantics=("parallel",)),
    )(x, *params)


# ------------------------------ "Module" glue --------------------------------

class Linear:
    """Mirrors torch.nn.Linear: y = x @ W.T + b, W stored as (out, in).

    The transpose and the bf16 cast of the weight are done ONCE here,
    not per call; bias stays f32 (added on the f32 accumulator).
    """

    def __init__(self, key, in_features, out_features, dtype=jnp.float32):
        kw, kb = jax.random.split(key)
        bound = 1.0 / (in_features ** 0.5)
        self.in_features = in_features
        self.out_features = out_features
        self.weight = jax.random.uniform(
            kw, (out_features, in_features), dtype, minval=-bound, maxval=bound)
        self.bias = jax.random.uniform(
            kb, (out_features,), dtype, minval=-bound, maxval=bound)

        # Pre-transposed (in, out) bf16 weight for the MXU; f32 row bias.
        self.w_t = self.weight.T.astype(jnp.bfloat16)
        self.b_row = self.bias.reshape(1, out_features).astype(jnp.float32)

    def __call__(self, x):
        return _pallas_chain(x, (self.w_t, self.b_row),
                             ops=(("linear", 0, 1),),
                             out_dim=self.out_features)


class ReLU:
    def __call__(self, x):
        return _pallas_chain(x, (), ops=(("relu",),), out_dim=x.shape[1])


class MultiInputLayer:
    """Mirrors onnx_explorer MultiInputLayer: records which prior outputs feed it."""

    def __init__(self, inputs):
        self.inputs = inputs

    def __call__(self, *args):
        # TODO(synk): reference MultiInputLayer defines no forward(); calling it
        # in PyTorch raises, so there is nothing to lower.
        raise NotImplementedError("MultiInputLayer has no forward() in the reference")


class CustomModel:
    """Port of CustomModel.forward.

    Fast path: if the layer list is a pure Linear/ReLU chain (no
    MultiInputLayer routing), the entire network is fused into ONE Pallas
    kernel — same result as the sequential loop, without HBM round-trips of
    the intermediates.  Otherwise the faithful loop + outputs-dict routing runs.
    """

    def __init__(self, layers):
        self.layers = list(layers)
        self._fused = self._build_fused()

    def _build_fused(self):
        if not self.layers or not all(
                isinstance(l, (Linear, ReLU)) for l in self.layers):
            return None
        ops, params, out_dim = [], [], None
        for layer in self.layers:
            if isinstance(layer, Linear):
                ops.append(("linear", len(params), len(params) + 1))
                params.extend([layer.w_t, layer.b_row])
                out_dim = layer.out_features
            else:
                ops.append(("relu",))
        return tuple(ops), tuple(params), out_dim

    def __call__(self, x):
        if self._fused is not None:
            ops, params, out_dim = self._fused
            if out_dim is None:          # ReLU-only chain keeps input width
                out_dim = x.shape[1]
            return _pallas_chain(x, params, ops=ops, out_dim=out_dim)

        # Faithful fallback: sequential loop + outputs dict + MultiInput routing.
        outputs = {}
        for idx, layer in enumerate(self.layers):
            if isinstance(layer, MultiInputLayer):
                inputs = [outputs[name] for name in layer.inputs]
                x = layer(*inputs)
            else:
                x = layer(x)
            outputs[f"layer{idx}"] = x
        return x


# --------------------------------- main --------------------------------------

if __name__ == "__main__":
    key = jax.random.PRNGKey(0)
    k_x, k_l0, k_l2 = jax.random.split(key, 3)

    batch, d_in, d_hidden, d_out = 8, 32, 64, 16
    x = jax.random.normal(k_x, (batch, d_in), jnp.float32)

    model = CustomModel([
        Linear(k_l0, d_in, d_hidden),
        ReLU(),
        Linear(k_l2, d_hidden, d_out),
    ])

    y = jax.block_until_ready(model(x))
    assert y.shape == (batch, d_out), y.shape

    # Tight check against a reference using the same bf16-weight / f32-acc math.
    w0, b0 = model.layers[0].weight, model.layers[0].bias
    w2, b2 = model.layers[2].weight, model.layers[2].bias
    bf = jnp.bfloat16
    h = jnp.dot(x.astype(bf), w0.T.astype(bf),
                preferred_element_type=jnp.float32) + b0
    h = jnp.maximum(h, 0.0)
    ref_bf = jnp.dot(h.astype(bf), w2.T.astype(bf),
                     preferred_element_type=jnp.float32) + b2
    assert jnp.allclose(y, ref_bf, atol=1e-4, rtol=1e-4), \
        float(jnp.max(jnp.abs(y - ref_bf)))

    # Loose sanity check against full-f32 math (bf16 weight quantization noise).
    ref32 = jnp.maximum(x @ w0.T + b0, 0.0) @ w2.T + b2
    assert jnp.allclose(y, ref32, atol=5e-2, rtol=5e-2), \
        float(jnp.max(jnp.abs(y - ref32)))

    print("KERNEL_OK")
</pallas_src>

<mosaic_0001>
module attributes {stable_mosaic.version = 11 : i64} {
  func.func @kernel(%arg0: i32, %arg1: memref<8x32xf32, #tpu.memory_space<vmem>>, %arg2: memref<32x64xbf16, #tpu.memory_space<vmem>>, %arg3: memref<1x64xf32, #tpu.memory_space<vmem>>, %arg4: memref<64x16xbf16, #tpu.memory_space<vmem>>, %arg5: memref<1x16xf32, #tpu.memory_space<vmem>>, %arg6: memref<8x16xf32, #tpu.memory_space<vmem>>) attributes {dimension_semantics = [#tpu.dimension_semantics<parallel>], iteration_bounds = array<i64: 1>, scalar_prefetch = 0 : i64, scratch_operands = 0 : i64, tpu.core_type = #tpu.core_type<tc>, window_params = [{transform_indices = @transform_0, window_bounds = array<i64: 8, 32>}, {pipeline_mode = #tpu.pipeline_mode<synchronous>, transform_indices = @transform_1, window_bounds = array<i64: 32, 64>}, {pipeline_mode = #tpu.pipeline_mode<synchronous>, transform_indices = @transform_2, window_bounds = array<i64: 1, 64>}, {pipeline_mode = #tpu.pipeline_mode<synchronous>, transform_indices = @transform_3, window_bounds = array<i64: 64, 16>}, {pipeline_mode = #tpu.pipeline_mode<synchronous>, transform_indices = @transform_4, window_bounds = array<i64: 1, 16>}, {transform_indices = @transform_5, window_bounds = array<i64: 8, 16>}]} {
    %c0 = arith.constant 0 : index
    %c0_0 = arith.constant 0 : index
    %0 = vector.load %arg1[%c0, %c0_0] : memref<8x32xf32, #tpu.memory_space<vmem>>, vector<8x32xf32>
    %c0_1 = arith.constant 0 : index
    %c0_2 = arith.constant 0 : index
    %1 = vector.load %arg2[%c0_1, %c0_2] : memref<32x64xbf16, #tpu.memory_space<vmem>>, vector<32x64xbf16>
    %c0_3 = arith.constant 0 : index
    %c0_4 = arith.constant 0 : index
    %2 = vector.load %arg3[%c0_3, %c0_4] : memref<1x64xf32, #tpu.memory_space<vmem>>, vector<1x64xf32>
    %3 = arith.truncf %0 : vector<8x32xf32> to vector<8x32xbf16>
    %cst = arith.constant dense<0.000000e+00> : vector<8x64xf32>
    %4 = tpu.matmul %3, %1, %cst {dimension_numbers = #tpu.dot_dimension_numbers<[1], [0], [0], [1], [0, 0, 1, 1], [], []>} : vector<8x32xbf16>, vector<32x64xbf16>, vector<8x64xf32> -> vector<8x64xf32>
    %5 = vector.broadcast %2 : vector<1x64xf32> to vector<8x64xf32>
    %6 = arith.addf %4, %5 : vector<8x64xf32>
    %cst_5 = arith.constant 0.000000e+00 : f32
    %7 = vector.broadcast %cst_5 : f32 to vector<8x64xf32>
    %8 = arith.maximumf %6, %7 : vector<8x64xf32>
    %c0_6 = arith.constant 0 : index
    %c0_7 = arith.constant 0 : index
    %9 = vector.load %arg4[%c0_6, %c0_7] : memref<64x16xbf16, #tpu.memory_space<vmem>>, vector<64x16xbf16>
    %c0_8 = arith.constant 0 : index
    %c0_9 = arith.constant 0 : index
    %10 = vector.load %arg5[%c0_8, %c0_9] : memref<1x16xf32, #tpu.memory_space<vmem>>, vector<1x16xf32>
    %11 = arith.truncf %8 : vector<8x64xf32> to vector<8x64xbf16>
    %cst_10 = arith.constant dense<0.000000e+00> : vector<8x16xf32>
    %12 = tpu.matmul %11, %9, %cst_10 {dimension_numbers = #tpu.dot_dimension_numbers<[1], [0], [0], [1], [0, 0, 1, 1], [], []>} : vector<8x64xbf16>, vector<64x16xbf16>, vector<8x16xf32> -> vector<8x16xf32>
    %13 = vector.broadcast %10 : vector<1x16xf32> to vector<8x16xf32>
    %14 = arith.addf %12, %13 : vector<8x16xf32>
    %c0_11 = arith.constant 0 : index
    %c0_12 = arith.constant 0 : index
    %15 = vector.load %arg6[%c0_11, %c0_12] : memref<8x16xf32, #tpu.memory_space<vmem>>, vector<8x16xf32>
    tpu.vector_store %arg6[%c0_11, %c0_12], %14 {strides = array<i32>} : memref<8x16xf32, #tpu.memory_space<vmem>>, vector<8x16xf32>,
    return
  }
  func.func @transform_0(%arg0: i32) -> (i32, i32) {
    %c0_i32 = arith.constant 0 : i32
    %c0_i32_0 = arith.constant 0 : i32
    return %arg0, %c0_i32 : i32, i32
  }
  func.func @transform_1(%arg0: i32) -> (i32, i32) {
    %c0_i32 = arith.constant 0 : i32
    %c0_i32_0 = arith.constant 0 : i32
    %c0_i32_1 = arith.constant 0 : i32
    return %c0_i32, %c0_i32_0 : i32, i32
  }
  func.func @transform_2(%arg0: i32) -> (i32, i32) {
    %c0_i32 = arith.constant 0 : i32
    %c0_i32_0 = arith.constant 0 : i32
    %c0_i32_1 = arith.constant 0 : i32
    return %c0_i32, %c0_i32_0 : i32, i32
  }
  func.func @transform_3(%arg0: i32) -> (i32, i32) {
    %c0_i32 = arith.constant 0 : i32
    %c0_i32_0 = arith.constant 0 : i32
    %c0_i32_1 = arith.constant 0 : i32
    return %c0_i32, %c0_i32_0 : i32, i32
  }
  func.func @transform_4(%arg0: i32) -> (i32, i32) {
    %c0_i32 = arith.constant 0 : i32
    %c0_i32_0 = arith.constant 0 : i32
    %c0_i32_1 = arith.constant 0 : i32
    return %c0_i32, %c0_i32_0 : i32, i32
  }
  func.func @transform_5(%arg0: i32) -> (i32, i32) {
    %c0_i32 = arith.constant 0 : i32
    %c0_i32_0 = arith.constant 0 : i32
    return %arg0, %c0_i32 : i32, i32
  }
}

</mosaic_0001>

<llo_original>
// kernel: _pallas_chain.1
$region0: #{_pallas_chain.1}
  #allocation0 [shape = 'u32[]', space=smem, size = 0x4, offset = 0x4, fixed_abs, tag = 'smem constant byte address 0x4 - core index']
  #allocation1 [shape = 'u32[144,128]{1,0:T(1,128)}', space=vmem, size = 0x12000, scoped, tag = 'internal scratch']
  %s0 = inlined_call_operand.vmem [shape: f32[8,32], index: 0, kind: input, shape index: {}]
  %s1 = inlined_call_operand.vmem [shape: bf16[32,64], index: 1, kind: input, shape index: {}]
  %s2 = inlined_call_operand.vmem [shape: f32[1,64], index: 2, kind: input, shape index: {}]
  %s3 = inlined_call_operand.vmem [shape: bf16[64,16], index: 3, kind: input, shape index: {}]
  %s4 = inlined_call_operand.vmem [shape: f32[1,16], index: 4, kind: input, shape index: {}]
  %s5 = inlined_call_operand.hbm [shape: f32[8,16], index: 5, kind: output, shape index: {}]
  %s6 = sld [smem:[#allocation0]]
  $region30: #{_pallas_chain.1} parent=0
    _
  %s8 = ssub.s32 1, %s6
  %s9 = scalar_select 0, %s8, %s6
  $region1: #{_pallas_chain.1} parent=0
    #allocation2 [shape = 'u8[4096]{0}', space=vmem, size = 0x1000, scoped, tag = 'output window, operand 0, single buffered']
    #allocation3 [shape = 's32[1]{0}', space=sflag, size = 0x4, scoped, tag = 'scoped memory for _pallas_chain.1']
    %10 = vsyncpa [#allocation3], 0
    // Predicated region
    $region2: #{_pallas_chain.1} parent=1 // pred_check
      _
    $region3: #{_pallas_chain.1} parent=1 // pred_check_branch
      %12 = sbr.rel (0) target = $region5
    $region4: #{_pallas_chain.1} parent=1 // pred_region
      _
    $region5: #{_pallas_chain.1} parent=1 // pred_fallthru
      _
    // Predicated region
    $region6: #{_pallas_chain.1} parent=1 // pred_check
      _
    $region7: #{_pallas_chain.1} parent=1 // pred_check_branch
      %14 = sbr.rel (0) target = $region9
    $region8: #{_pallas_chain.1} parent=1 // pred_region
      _
    $region9: #{_pallas_chain.1} parent=1 // pred_fallthru
      _
    // Predicated region
    $region10: #{_pallas_chain.1} parent=1 // pred_check
      _
    $region11: #{_pallas_chain.1} parent=1 // pred_check_branch
      %16 = sbr.rel (0) target = $region13
    $region12: #{_pallas_chain.1} parent=1 // pred_region
      _
    $region13: #{_pallas_chain.1} parent=1 // pred_fallthru
      _
    // Predicated region
    $region14: #{_pallas_chain.1} parent=1 // pred_check
      _
    $region15: #{_pallas_chain.1} parent=1 // pred_check_branch
      %18 = sbr.rel (0) target = $region17
    $region16: #{_pallas_chain.1} parent=1 // pred_region
      _
    $region17: #{_pallas_chain.1} parent=1 // pred_fallthru
      _
    // Predicated region
    $region18: #{_pallas_chain.1} parent=1 // pred_check
      _
    $region19: #{_pallas_chain.1} parent=1 // pred_check_branch
      %20 = sbr.rel (0) target = $region21
    $region20: #{_pallas_chain.1} parent=1 // pred_region
      _
    $region21: #{_pallas_chain.1} parent=1 // pred_fallthru
      _
    %v22 = vld [vmem:[%s0] sm:$0xff]
    %v23 = vld [vmem:[%s1] sm:$0xf]
    %v24 = vld [vmem:[%s1 + $0x4] sm:$0xf]
    %v25 = vld [vmem:[%s1 + $0x8] sm:$0xf]
    %v26 = vld [vmem:[%s1 + $0xc] sm:$0xf]
    %v27 = vld [vmem:[%s2] sm:$0x1]
    %v28 = vpack.c.bf16 %v22, %v22
    %v30 = vlaneseq
    %v31 = vshrl.u32 %v30, 7
    %v32 = vsub.s32 0, %v31
    %v33 = vrot.slane %v27, %v32
    %v39 = vunpack.c.l.b16 %v23
    %v40 = vunpack.c.l.b16 %v24
    %v41 = vunpack.c.l.b16 %v25
    %v42 = vunpack.c.l.b16 %v26
    %v43 = vpack.c.b16 %v40, %v39
    %v44 = vpack.c.b16 %v42, %v41
    %vm47 = vcmask 261120
    %v49 = vsel %vm47, %v28, 0
    %51 = vmatprep.subr.bf16.mxu0 0
    %52 = vmatpush1.bf16.msra.mxu0 %v43
    %53 = vmatprep.subr.bf16.mxu0 0
    %54 = vmatpush1.bf16.msra.mxu0 %v44
    %55 = vmatprep.subr.bf16.mxu0 0
    %56 = vmatpush1.bf16.msra.mxu0 0
    %57 = vmatprep.subr.bf16.mxu0 0
    %58 = vmatpush1.bf16.msra.mxu0 0
    %59 = vmatprep.subr.bf16.mxu0 0
    %60 = vmatpush1.bf16.msra.mxu0 0
    %61 = vmatprep.subr.bf16.mxu0 0
    %62 = vmatpush1.bf16.msra.mxu0 0
    %63 = vmatprep.subr.bf16.mxu0 0
    %64 = vmatpush1.bf16.msra.mxu0 0
    %65 = vmatprep.subr.bf16.mxu0 0
    %66 = vmatpush1.bf16.msra.mxu0 0
    %67 = vmatprep.subr.bf16.mxu0 0
    %68 = vmatpush1.bf16.msra.mxu0 0
    %69 = vmatprep.subr.bf16.mxu0 0
    %70 = vmatpush1.bf16.msra.mxu0 0
    %71 = vmatprep.subr.bf16.mxu0 0
    %72 = vmatpush1.bf16.msra.mxu0 0
    %73 = vmatprep.subr.bf16.mxu0 0
    %74 = vmatpush1.bf16.msra.mxu0 0
    %75 = vmatprep.subr.bf16.mxu0 0
    %76 = vmatpush1.bf16.msra.mxu0 0
    %77 = vmatprep.subr.bf16.mxu0 0
    %78 = vmatpush1.bf16.msra.mxu0 0
    %79 = vmatprep.subr.bf16.mxu0 0
    %80 = vmatpush1.bf16.msra.mxu0 0
    %81 = vmatprep.subr.bf16.mxu0 0
    %82 = vmatpush1.bf16.msra.mxu0 0
    %83 = vmatprep.mubr.bf16.mxu0 0
    %84 = vmatmul.mubr.bf16.gmra.mrb[0].mxu0 %v49
    %v85 = vpop.f32.mrb[0].mxu0
    %v86 = vadd.f32 %v33, %v85
    %v87 = vpop.f32.mrb[0].mxu0
    %v88 = vpop.f32.mrb[0].mxu0
    %v89 = vpop.f32.mrb[0].mxu0
    %90 = vdwg.mxu0
    %v91 = vmax.f32 %v86, 0.0
    %v92 = vld [vmem:[%s3] sm:$0xf]
    %v93 = vld [vmem:[%s3 + $0x4] sm:$0xf]
    %v94 = vld [vmem:[%s3 + $0x8] sm:$0xf]
    %v95 = vld [vmem:[%s3 + $0xc] sm:$0xf]
    %v96 = vld [vmem:[%s3 + $0x10] sm:$0xf]
    %v97 = vld [vmem:[%s3 + $0x14] sm:$0xf]
    %v98 = vld [vmem:[%s3 + $0x18] sm:$0xf]
    %v99 = vld [vmem:[%s3 + $0x1c] sm:$0xf]
    %v100 = vld [vmem:[%s4] sm:$0x1]
    %v101 = vpack.c.bf16 %v91, %v91
    %v103 = vlaneseq
    %v104 = vshrl.u32 %v103, 7
    %v105 = vsub.s32 0, %v104
    %v106 = vrot.slane %v100, %v105
    %v116 = vunpack.c.l.b16 %v92
    %v117 = vunpack.c.l.b16 %v93
    %v118 = vunpack.c.l.b16 %v94
    %v119 = vunpack.c.l.b16 %v95
    %v120 = vunpack.c.l.b16 %v96
    %v121 = vunpack.c.l.b16 %v97
    %v122 = vunpack.c.l.b16 %v98
    %v123 = vunpack.c.l.b16 %v99
    %v124 = vpack.c.b16 %v117, %v116
    %v125 = vpack.c.b16 %v119, %v118
    %v126 = vpack.c.b16 %v121, %v120
    %v127 = vpack.c.b16 %v123, %v122
    %vm132 = vcmask 523264
    %v134 = vsel %vm132, %v101, 0
    %136 = vmatprep.subr.bf16.mxu0 0
    %137 = vmatpush1.bf16.msra.mxu0 %v124
    %138 = vmatprep.subr.bf16.mxu0 0
    %139 = vmatpush1.bf16.msra.mxu0 %v125
    %140 = vmatprep.subr.bf16.mxu0 0
    %141 = vmatpush1.bf16.msra.mxu0 %v126
    %142 = vmatprep.subr.bf16.mxu0 0
    %143 = vmatpush1.bf16.msra.mxu0 %v127
    %144 = vmatprep.subr.bf16.mxu0 0
    %145 = vmatpush1.bf16.msra.mxu0 0
    %146 = vmatprep.subr.bf16.mxu0 0
    %147 = vmatpush1.bf16.msra.mxu0 0
    %148 = vmatprep.subr.bf16.mxu0 0
    %149 = vmatpush1.bf16.msra.mxu0 0
    %150 = vmatprep.subr.bf16.mxu0 0
    %151 = vmatpush1.bf16.msra.mxu0 0
    %152 = vmatprep.subr.bf16.mxu0 0
    %153 = vmatpush1.bf16.msra.mxu0 0
    %154 = vmatprep.subr.bf16.mxu0 0
    %155 = vmatpush1.bf16.msra.mxu0 0
    %156 = vmatprep.subr.bf16.mxu0 0
    %157 = vmatpush1.bf16.msra.mxu0 0
    %158 = vmatprep.subr.bf16.mxu0 0
    %159 = vmatpush1.bf16.msra.mxu0 0
    %160 = vmatprep.subr.bf16.mxu0 0
    %161 = vmatpush1.bf16.msra.mxu0 0
    %162 = vmatprep.subr.bf16.mxu0 0
    %163 = vmatpush1.bf16.msra.mxu0 0
    %164 = vmatprep.subr.bf16.mxu0 0
    %165 = vmatpush1.bf16.msra.mxu0 0
    %166 = vmatprep.subr.bf16.mxu0 0
    %167 = vmatpush1.bf16.msra.mxu0 0
    %168 = vmatprep.mubr.bf16.mxu0 0
    %169 = vmatmul.mubr.bf16.gmra.mrb[0].mxu0 %v134
    %v170 = vpop.f32.mrb[0].mxu0
    %v171 = vadd.f32 %v106, %v170
    %v172 = vpop.f32.mrb[0].mxu0
    %v173 = vpop.f32.mrb[0].mxu0
    %v174 = vpop.f32.mrb[0].mxu0
    %175 = vdwg.mxu0
    %vm176 = vcmask 130048
    %177 = vst.msk [vmem:[#allocation2] sm:$0xff] %vm176, %v171
    // Predicated region
    $region22: #{_pallas_chain.1} parent=1 // pred_check
      _
    $region23: #{_pallas_chain.1} parent=1 // pred_check_branch
      %179 = sbr.rel (0) target = $region25
    $region24: #{_pallas_chain.1} parent=1 // pred_region
      %s181 = ssub.s32 128, 128
      %182 = vsyncadd [#allocation3], %s181
      %s184 = sshll.u32 [#allocation2], 4
      %s185 = int_to_ptr.vmem [resolvable:$true] %s184
      %187 = dma.vmem_to_hbm [thread:$0]  %s185, 128, %s5, [#allocation3]
    $region25: #{_pallas_chain.1} parent=1 // pred_fallthru
      _
    // Predicated region
    $region26: #{_pallas_chain.1} parent=1 // pred_check
      _
    $region27: #{_pallas_chain.1} parent=1 // pred_check_branch
      %189 = sbr.rel (0) target = $region29
    $region28: #{_pallas_chain.1} parent=1 // pred_region
      %190 = dma.done [#allocation3], 128
    $region29: #{_pallas_chain.1} parent=1 // pred_fallthru
      _
    %191 = vsyncpa [#allocation3], 1

</llo_original>
